<compile_context>
chip_gen: v6e
topology: v6e:2x2x1
jax: 0.10.0
libtpu: 0.0.40
codegen_flags: <defaults>
</compile_context>

<pallas_src>
import jax
import jax.numpy as jnp
from jax.experimental import pallas as pl
from jax.experimental.pallas import tpu as pltpu


def _softq_kernel(state_ref, action_ref, w1s_ref, w1a_ref, b1_ref,
                  w2_ref, b2_ref, w3_ref, b3_ref, o_ref):
    # Fused concat:  [state, action] @ W1  ==  state @ W1s + action @ W1a.
    h1 = (jnp.dot(state_ref[...], w1s_ref[...],
                  preferred_element_type=jnp.float32)
          + jnp.dot(action_ref[...], w1a_ref[...],
                    preferred_element_type=jnp.float32)
          + b1_ref[...])
    h1 = jnp.maximum(h1, 0.0)                                   # ReLU (f32)
    h2 = jnp.dot(h1, w2_ref[...],
                 preferred_element_type=jnp.float32) + b2_ref[...]
    h2 = jnp.maximum(h2, 0.0)                                   # ReLU (f32)
    q = jnp.dot(h2, w3_ref[...],
                preferred_element_type=jnp.float32) + b3_ref[0, 0]
    o_ref[...] = q.astype(o_ref.dtype)


def soft_q_forward(state, action, params, *, batch_tile=256):
    """Pallas implementation of SoftQNetwork.forward(state, action).

    params = (w1s, w1a, b1, w2, b2, w3, b3) with weights pre-transposed to
    (in_features, out_features); w1 is pre-split along its input axis into the
    state part (num_inputs, H) and the action part (num_actions, H).
    """
    w1s, w1a, b1, w2, b2, w3, b3 = params
    B, n_in = state.shape
    _, n_act = action.shape
    H = w1s.shape[1]
    out_shape = jax.ShapeDtypeStruct((B, 1), jnp.float32)

    vmem = pl.BlockSpec(memory_space=pltpu.MemorySpace.VMEM)
    smem = pl.BlockSpec(memory_space=pltpu.MemorySpace.SMEM)

    if B <= batch_tile or B % batch_tile != 0:
        # Small / irregular batch: no grid, everything VMEM-resident in one
        # shot (total footprint is tiny), scalar b3 in SMEM.
        return pl.pallas_call(
            _softq_kernel,
            out_shape=out_shape,
            in_specs=[vmem, vmem,            # state, action
                      vmem, vmem, vmem,      # w1s, w1a, b1
                      vmem, vmem,            # w2, b2
                      vmem, smem],           # w3, b3 (SMEM scalar)
            out_specs=vmem,
        )(state, action, w1s, w1a, b1, w2, b2, w3, b3)

    # Large training batch: tile the batch axis; stream state/action/out with
    # double-buffered DMA while weights/biases stay resident (constant
    # index_maps => fetched once).  "parallel" lets the batch axis shard
    # across TensorCores on v7x.
    tb = batch_tile
    grid = (B // tb,)
    const2 = lambda i: (0, 0)
    return pl.pallas_call(
        _softq_kernel,
        out_shape=out_shape,
        grid=grid,
        in_specs=[
            pl.BlockSpec((tb, n_in), lambda i: (i, 0)),    # state tile
            pl.BlockSpec((tb, n_act), lambda i: (i, 0)),   # action tile
            pl.BlockSpec((n_in, H), const2),               # w1s (resident)
            pl.BlockSpec((n_act, H), const2),              # w1a (resident)
            pl.BlockSpec((1, H), const2),                  # b1  (resident)
            pl.BlockSpec((H, H), const2),                  # w2  (resident)
            pl.BlockSpec((1, H), const2),                  # b2  (resident)
            pl.BlockSpec((H, 1), const2),                  # w3  (resident)
            smem,                                          # b3  (SMEM scalar)
        ],
        out_specs=pl.BlockSpec((tb, 1), lambda i: (i, 0)),
        compiler_params=pltpu.CompilerParams(
            dimension_semantics=("parallel",)),
    )(state, action, w1s, w1a, b1, w2, b2, w3, b3)


def init_soft_q_params(key, num_inputs, num_actions, hidden_size, init_w=0.003):
    """Init mirroring the PyTorch module's parameter shapes/distributions.

    linear1/linear2: PyTorch-default U(-1/sqrt(fan_in), 1/sqrt(fan_in)).
    linear3: U(-init_w, init_w) for weight and bias.
    Weights stored transposed (in, out); W1 pre-split into (state, action) parts.
    """
    in1 = num_inputs + num_actions
    k1, k2, k3, k4, k5, k6 = jax.random.split(key, 6)
    bound1 = 1.0 / jnp.sqrt(in1)
    bound2 = 1.0 / jnp.sqrt(hidden_size)
    w1 = jax.random.uniform(k1, (in1, hidden_size), jnp.float32, -bound1, bound1)
    w1s, w1a = w1[:num_inputs], w1[num_inputs:]
    b1 = jax.random.uniform(k2, (1, hidden_size), jnp.float32, -bound1, bound1)
    w2 = jax.random.uniform(k3, (hidden_size, hidden_size), jnp.float32, -bound2, bound2)
    b2 = jax.random.uniform(k4, (1, hidden_size), jnp.float32, -bound2, bound2)
    w3 = jax.random.uniform(k5, (hidden_size, 1), jnp.float32, -init_w, init_w)
    b3 = jax.random.uniform(k6, (1, 1), jnp.float32, -init_w, init_w)
    return (w1s, w1a, b1, w2, b2, w3, b3)


def soft_q_reference(state, action, params):
    """Pure-JAX reference for correctness checking."""
    w1s, w1a, b1, w2, b2, w3, b3 = params
    w1 = jnp.concatenate([w1s, w1a], axis=0)
    x = jnp.concatenate([state, action], axis=1)
    x = jax.nn.relu(x @ w1 + b1)
    x = jax.nn.relu(x @ w2 + b2)
    return x @ w3 + b3


if __name__ == "__main__":
    num_inputs, num_actions, hidden = 12, 4, 32
    key = jax.random.PRNGKey(0)
    k_s, k_a, k_p, k_s2, k_a2 = jax.random.split(key, 5)
    params = init_soft_q_params(k_p, num_inputs, num_actions, hidden)

    # Small batch -> grid-free single-shot path.
    batch = 8
    state = jax.random.normal(k_s, (batch, num_inputs), jnp.float32)
    action = jax.random.normal(k_a, (batch, num_actions), jnp.float32)
    q = jax.block_until_ready(soft_q_forward(state, action, params))
    q_ref = soft_q_reference(state, action, params)
    assert q.shape == (batch, 1)
    assert jnp.allclose(q, q_ref, atol=1e-5, rtol=1e-5), (q, q_ref)

    # Training-scale batch -> batch-tiled "parallel" grid path.
    batch2 = 512
    state2 = jax.random.normal(k_s2, (batch2, num_inputs), jnp.float32)
    action2 = jax.random.normal(k_a2, (batch2, num_actions), jnp.float32)
    q2 = jax.block_until_ready(soft_q_forward(state2, action2, params))
    q2_ref = soft_q_reference(state2, action2, params)
    assert q2.shape == (batch2, 1)
    assert jnp.allclose(q2, q2_ref, atol=1e-5, rtol=1e-5), (q2, q2_ref)

    print("KERNEL_OK")
</pallas_src>

<mosaic_0001>
module attributes {stable_mosaic.version = 11 : i64} {
  func.func @_softq_kernel(%arg0: memref<8x12xf32, #tpu.memory_space<vmem>>, %arg1: memref<8x4xf32, #tpu.memory_space<vmem>>, %arg2: memref<12x32xf32, #tpu.memory_space<vmem>>, %arg3: memref<4x32xf32, #tpu.memory_space<vmem>>, %arg4: memref<1x32xf32, #tpu.memory_space<vmem>>, %arg5: memref<32x32xf32, #tpu.memory_space<vmem>>, %arg6: memref<1x32xf32, #tpu.memory_space<vmem>>, %arg7: memref<32x1xf32, #tpu.memory_space<vmem>>, %arg8: memref<1x1xf32, #tpu.memory_space<smem>>, %arg9: memref<8x1xf32, #tpu.memory_space<vmem>>) attributes {dimension_semantics = [], scalar_prefetch = 0 : i64, scratch_operands = 0 : i64, tpu.core_type = #tpu.core_type<tc>} {
    %c0 = arith.constant 0 : index
    %c0_0 = arith.constant 0 : index
    %0 = vector.load %arg0[%c0, %c0_0] : memref<8x12xf32, #tpu.memory_space<vmem>>, vector<8x12xf32>
    %c0_1 = arith.constant 0 : index
    %c0_2 = arith.constant 0 : index
    %1 = vector.load %arg2[%c0_1, %c0_2] : memref<12x32xf32, #tpu.memory_space<vmem>>, vector<12x32xf32>
    %cst = arith.constant dense<0.000000e+00> : vector<8x32xf32>
    %2 = tpu.matmul %0, %1, %cst {dimension_numbers = #tpu.dot_dimension_numbers<[1], [0], [0], [1], [0, 0, 1, 1], [], []>} : vector<8x12xf32>, vector<12x32xf32>, vector<8x32xf32> -> vector<8x32xf32>
    %c0_3 = arith.constant 0 : index
    %c0_4 = arith.constant 0 : index
    %3 = vector.load %arg1[%c0_3, %c0_4] : memref<8x4xf32, #tpu.memory_space<vmem>>, vector<8x4xf32>
    %c0_5 = arith.constant 0 : index
    %c0_6 = arith.constant 0 : index
    %4 = vector.load %arg3[%c0_5, %c0_6] : memref<4x32xf32, #tpu.memory_space<vmem>>, vector<4x32xf32>
    %cst_7 = arith.constant dense<0.000000e+00> : vector<8x32xf32>
    %5 = tpu.matmul %3, %4, %cst_7 {dimension_numbers = #tpu.dot_dimension_numbers<[1], [0], [0], [1], [0, 0, 1, 1], [], []>} : vector<8x4xf32>, vector<4x32xf32>, vector<8x32xf32> -> vector<8x32xf32>
    %6 = arith.addf %2, %5 : vector<8x32xf32>
    %c0_8 = arith.constant 0 : index
    %c0_9 = arith.constant 0 : index
    %7 = vector.load %arg4[%c0_8, %c0_9] : memref<1x32xf32, #tpu.memory_space<vmem>>, vector<1x32xf32>
    %8 = vector.broadcast %7 : vector<1x32xf32> to vector<8x32xf32>
    %9 = arith.addf %6, %8 : vector<8x32xf32>
    %cst_10 = arith.constant 0.000000e+00 : f32
    %10 = vector.broadcast %cst_10 : f32 to vector<8x32xf32>
    %11 = arith.maximumf %9, %10 : vector<8x32xf32>
    %c0_11 = arith.constant 0 : index
    %c0_12 = arith.constant 0 : index
    %12 = vector.load %arg5[%c0_11, %c0_12] : memref<32x32xf32, #tpu.memory_space<vmem>>, vector<32x32xf32>
    %cst_13 = arith.constant dense<0.000000e+00> : vector<8x32xf32>
    %13 = tpu.matmul %11, %12, %cst_13 {dimension_numbers = #tpu.dot_dimension_numbers<[1], [0], [0], [1], [0, 0, 1, 1], [], []>} : vector<8x32xf32>, vector<32x32xf32>, vector<8x32xf32> -> vector<8x32xf32>
    %c0_14 = arith.constant 0 : index
    %c0_15 = arith.constant 0 : index
    %14 = vector.load %arg6[%c0_14, %c0_15] : memref<1x32xf32, #tpu.memory_space<vmem>>, vector<1x32xf32>
    %15 = vector.broadcast %14 : vector<1x32xf32> to vector<8x32xf32>
    %16 = arith.addf %13, %15 : vector<8x32xf32>
    %cst_16 = arith.constant 0.000000e+00 : f32
    %17 = vector.broadcast %cst_16 : f32 to vector<8x32xf32>
    %18 = arith.maximumf %16, %17 : vector<8x32xf32>
    %c0_17 = arith.constant 0 : index
    %c0_18 = arith.constant 0 : index
    %19 = vector.load %arg7[%c0_17, %c0_18] : memref<32x1xf32, #tpu.memory_space<vmem>>, vector<32x1xf32>
    %cst_19 = arith.constant dense<0.000000e+00> : vector<8x1xf32>
    %20 = tpu.matmul %18, %19, %cst_19 {dimension_numbers = #tpu.dot_dimension_numbers<[1], [0], [0], [1], [0, 0, 1, 1], [], []>} : vector<8x32xf32>, vector<32x1xf32>, vector<8x1xf32> -> vector<8x1xf32>
    %c0_20 = arith.constant 0 : index
    %c0_21 = arith.constant 0 : index
    %21 = memref.load %arg8[%c0_20, %c0_21] : memref<1x1xf32, #tpu.memory_space<smem>>
    %22 = vector.broadcast %21 : f32 to vector<8x1xf32>
    %23 = arith.addf %20, %22 : vector<8x1xf32>
    %c0_22 = arith.constant 0 : index
    %c0_23 = arith.constant 0 : index
    %24 = vector.load %arg9[%c0_22, %c0_23] : memref<8x1xf32, #tpu.memory_space<vmem>>, vector<8x1xf32>
    tpu.vector_store %arg9[%c0_22, %c0_23], %23 {strides = array<i32>} : memref<8x1xf32, #tpu.memory_space<vmem>>, vector<8x1xf32>,
    return
  }
}

</mosaic_0001>

<llo_original>
// kernel: tpu_custom_call.1
$region0: #{tpu_custom_call.1}
  #allocation0 [shape = 'u32[]', space=smem, size = 0x4, offset = 0x4, fixed_abs, tag = 'smem constant byte address 0x4 - core index']
  #allocation1 [shape = 'u32[144,128]{1,0:T(1,128)}', space=vmem, size = 0x12000, scoped, tag = 'internal scratch']
  #allocation2 [shape = 'f32[1,1]{1,0:T(1,128)S(6)}', space=smem, size = 0x200, scoped, tag = 'scoped memory for tpu_custom_call.1']
  %s0 = inlined_call_operand.vmem [shape: f32[8,12], index: 0, kind: input, shape index: {}]
  %s1 = inlined_call_operand.vmem [shape: f32[8,4], index: 1, kind: input, shape index: {}]
  %s2 = inlined_call_operand.vmem [shape: f32[12,32], index: 2, kind: input, shape index: {}]
  %s3 = inlined_call_operand.hbm [shape: f32[4,32], index: 3, kind: input, shape index: {}]
  %s4 = inlined_call_operand.hbm [shape: f32[1,32], index: 4, kind: input, shape index: {}]
  %s5 = inlined_call_operand.vmem [shape: f32[32,32], index: 5, kind: input, shape index: {}]
  %s6 = inlined_call_operand.vmem [shape: f32[1,32], index: 6, kind: input, shape index: {}]
  %s7 = inlined_call_operand.vmem [shape: f32[32,1], index: 7, kind: input, shape index: {}]
  %s8 = inlined_call_operand.<no memory space> [shape: f32[1,1], index: 8, kind: input, shape index: {}]
  %s9 = inlined_call_operand.vmem [shape: f32[8,1], index: 9, kind: output, shape index: {}]
  %s10 = sld [smem:[#allocation0]]
  $region54: #{tpu_custom_call.1} parent=0
    _
  %s12 = ssub.s32 1, %s10
  %s13 = scalar_select 0, %s12, %s10
  %14 = sst [smem:[#allocation2]] %s8
  $region1: #{tpu_custom_call.1} parent=0
    #allocation3 [shape = 'u8[2048]{0}', space=vmem, size = 0x800, scoped, tag = 'input window, operand 3, single buffered']
    #allocation4 [shape = 's32[1]{0}', space=sflag, size = 0x4, scoped, tag = 'scoped memory for tpu_custom_call.1']
    #allocation5 [shape = 'u8[512]{0}', space=vmem, size = 0x400, scoped, tag = 'input window, operand 4, single buffered']
    #allocation6 [shape = 's32[1]{0}', space=sflag, size = 0x4, scoped, tag = 'scoped memory for tpu_custom_call.1']
    %15 = vsyncpa [#allocation4], 0
    %16 = vsyncpa [#allocation6], 0
    // Predicated region
    $region2: #{tpu_custom_call.1} parent=1 // pred_check
      _
    $region3: #{tpu_custom_call.1} parent=1 // pred_check_branch
      %18 = sbr.rel (0) target = $region5
    $region4: #{tpu_custom_call.1} parent=1 // pred_region
      _
    $region5: #{tpu_custom_call.1} parent=1 // pred_fallthru
      _
    // Predicated region
    $region6: #{tpu_custom_call.1} parent=1 // pred_check
      _
    $region7: #{tpu_custom_call.1} parent=1 // pred_check_branch
      %20 = sbr.rel (0) target = $region9
    $region8: #{tpu_custom_call.1} parent=1 // pred_region
      _
    $region9: #{tpu_custom_call.1} parent=1 // pred_fallthru
      _
    // Predicated region
    $region10: #{tpu_custom_call.1} parent=1 // pred_check
      _
    $region11: #{tpu_custom_call.1} parent=1 // pred_check_branch
      %22 = sbr.rel (0) target = $region13
    $region12: #{tpu_custom_call.1} parent=1 // pred_region
      _
    $region13: #{tpu_custom_call.1} parent=1 // pred_fallthru
      _
    // Predicated region
    $region14: #{tpu_custom_call.1} parent=1 // pred_check
      _
    $region15: #{tpu_custom_call.1} parent=1 // pred_check_branch
      %24 = sbr.rel (0) target = $region17
    $region16: #{tpu_custom_call.1} parent=1 // pred_region
      %s26 = ssub.s32 64, 64
      %27 = vsyncadd [#allocation4], %s26
      %s29 = sshll.u32 [#allocation3], 4
      %s30 = int_to_ptr.vmem [resolvable:$true] %s29
      %32 = dma.hbm_to_vmem [thread:$0]  %s3, 64, %s30, [#allocation4]
    $region17: #{tpu_custom_call.1} parent=1 // pred_fallthru
      _
    // Predicated region
    $region18: #{tpu_custom_call.1} parent=1 // pred_check
      _
    $region19: #{tpu_custom_call.1} parent=1 // pred_check_branch
      %34 = sbr.rel (0) target = $region21
    $region20: #{tpu_custom_call.1} parent=1 // pred_region
      %s36 = ssub.s32 16, 16
      %37 = vsyncadd [#allocation6], %s36
      %s39 = sshll.u32 [#allocation5], 4
      %s40 = int_to_ptr.vmem [resolvable:$true] %s39
      %42 = dma.hbm_to_vmem [thread:$0]  %s4, 16, %s40, [#allocation6]
    $region21: #{tpu_custom_call.1} parent=1 // pred_fallthru
      _
    // Predicated region
    $region22: #{tpu_custom_call.1} parent=1 // pred_check
      _
    $region23: #{tpu_custom_call.1} parent=1 // pred_check_branch
      %44 = sbr.rel (0) target = $region25
    $region24: #{tpu_custom_call.1} parent=1 // pred_region
      _
    $region25: #{tpu_custom_call.1} parent=1 // pred_fallthru
      _
    // Predicated region
    $region26: #{tpu_custom_call.1} parent=1 // pred_check
      _
    $region27: #{tpu_custom_call.1} parent=1 // pred_check_branch
      %46 = sbr.rel (0) target = $region29
    $region28: #{tpu_custom_call.1} parent=1 // pred_region
      _
    $region29: #{tpu_custom_call.1} parent=1 // pred_fallthru
      _
    // Predicated region
    $region30: #{tpu_custom_call.1} parent=1 // pred_check
      _
    $region31: #{tpu_custom_call.1} parent=1 // pred_check_branch
      %48 = sbr.rel (0) target = $region33
    $region32: #{tpu_custom_call.1} parent=1 // pred_region
      _
    $region33: #{tpu_custom_call.1} parent=1 // pred_fallthru
      _
    // Predicated region
    $region34: #{tpu_custom_call.1} parent=1 // pred_check
      _
    $region35: #{tpu_custom_call.1} parent=1 // pred_check_branch
      %50 = sbr.rel (0) target = $region37
    $region36: #{tpu_custom_call.1} parent=1 // pred_region
      _
    $region37: #{tpu_custom_call.1} parent=1 // pred_fallthru
      _
    // Predicated region
    $region38: #{tpu_custom_call.1} parent=1 // pred_check
      _
    $region39: #{tpu_custom_call.1} parent=1 // pred_check_branch
      %52 = sbr.rel (0) target = $region41
    $region40: #{tpu_custom_call.1} parent=1 // pred_region
      %53 = dma.done [#allocation4], 64
    $region41: #{tpu_custom_call.1} parent=1 // pred_fallthru
      _
    // Predicated region
    $region42: #{tpu_custom_call.1} parent=1 // pred_check
      _
    $region43: #{tpu_custom_call.1} parent=1 // pred_check_branch
      %55 = sbr.rel (0) target = $region45
    $region44: #{tpu_custom_call.1} parent=1 // pred_region
      %56 = dma.done [#allocation6], 16
    $region45: #{tpu_custom_call.1} parent=1 // pred_fallthru
      _
    %v57 = vld [vmem:[%s0] sm:$0xff]
    %v58 = vld [vmem:[%s2] sm:$0xff]
    %v59 = vld [vmem:[%s2 + $0x8] sm:$0xf]
    %v60 = vld [vmem:[%s1] sm:$0xff]
    %v61 = vld [vmem:[#allocation3] sm:$0xf]
    %vm62 = vcmask 31744
    %v64 = vsel %vm62, %v60, 0
    %vm66 = vcmask 1043456
    %v68 = vsel %vm66, %v61, 0
    %70 = vmatprep.subr.mxu0 0.0
    %71 = vmatpush1.msra.mxu0 0.0
    %72 = vmatprep.subr.mxu0 0.0
    %73 = vmatpush1.msra.mxu0 0.0
    %74 = vmatprep.subr.mxu0 0.0
    %75 = vmatpush1.msra.mxu0 0.0
    %76 = vmatprep.subr.mxu0 0.0
    %77 = vmatpush1.msra.mxu0 0.0
    %78 = vmatprep.subr.mxu0 0.0
    %79 = vmatpush1.msra.mxu0 0.0
    %80 = vmatprep.subr.mxu0 0.0
    %81 = vmatpush1.msra.mxu0 0.0
    %82 = vmatprep.subr.mxu0 0.0
    %83 = vmatpush1.msra.mxu0 0.0
    %84 = vmatprep.subr.mxu0 0.0
    %85 = vmatpush1.msra.mxu0 0.0
    %86 = vmatprep.subr.mxu0 0.0
    %87 = vmatpush1.msra.mxu0 0.0
    %88 = vmatprep.subr.mxu0 0.0
    %89 = vmatpush1.msra.mxu0 0.0
    %90 = vmatprep.subr.mxu0 0.0
    %91 = vmatpush1.msra.mxu0 0.0
    %92 = vmatprep.subr.mxu0 0.0
    %93 = vmatpush1.msra.mxu0 0.0
    %94 = vmatprep.subr.mxu0 0.0
    %95 = vmatpush1.msra.mxu0 0.0
    %96 = vmatprep.subr.mxu0 0.0
    %97 = vmatpush1.msra.mxu0 0.0
    %98 = vmatprep.subr.mxu0 0.0
    %99 = vmatpush1.msra.mxu0 0.0
    %100 = vmatprep.subr.mxu0 0.0
    %101 = vmatpush1.msra.mxu0 %v68
    %102 = vmatprep.subr.mxu0 0.0
    %103 = vmatpush2.msra.mxu0 0.0
    %104 = vmatprep.subr.mxu0 0.0
    %105 = vmatpush2.msra.mxu0 0.0
    %106 = vmatprep.subr.mxu0 0.0
    %107 = vmatpush2.msra.mxu0 0.0
    %108 = vmatprep.subr.mxu0 0.0
    %109 = vmatpush2.msra.mxu0 0.0
    %110 = vmatprep.subr.mxu0 0.0
    %111 = vmatpush2.msra.mxu0 0.0
    %112 = vmatprep.subr.mxu0 0.0
    %113 = vmatpush2.msra.mxu0 0.0
    %114 = vmatprep.subr.mxu0 0.0
    %115 = vmatpush2.msra.mxu0 0.0
    %116 = vmatprep.subr.mxu0 0.0
    %117 = vmatpush2.msra.mxu0 0.0
    %118 = vmatprep.subr.mxu0 0.0
    %119 = vmatpush2.msra.mxu0 0.0
    %120 = vmatprep.subr.mxu0 0.0
    %121 = vmatpush2.msra.mxu0 0.0
    %122 = vmatprep.subr.mxu0 0.0
    %123 = vmatpush2.msra.mxu0 0.0
    %124 = vmatprep.subr.mxu0 0.0
    %125 = vmatpush2.msra.mxu0 0.0
    %126 = vmatprep.subr.mxu0 0.0
    %127 = vmatpush2.msra.mxu0 0.0
    %128 = vmatprep.subr.mxu0 0.0
    %129 = vmatpush2.msra.mxu0 0.0
    %130 = vmatprep.subr.mxu0 0.0
    %131 = vmatpush2.msra.mxu0 0.0
    %132 = vmatprep.subr.mxu0 0.0
    %133 = vmatpush2.msra.mxu0 0.0
    %134 = vmatprep.mubr.f32.mxu0 0.0
    %135 = vmatmul.mubr.f32.gmra.mxu0 %v64
    %v136 = vpop.f32.mrf.mxu0
    %v137 = vadd.f32 0.0, %v136
    %v138 = vpop.f32.mrf.mxu0
    %139 = vdwg.mxu0
    %vm140 = vcmask 97280
    %v142 = vsel %vm140, %v57, 0
    %v145 = vsel %vm66, %v59, 0
    %147 = vmatprep.subr.mxu0 0.0
    %148 = vmatpush1.msra.mxu0 0.0
    %149 = vmatprep.subr.mxu0 0.0
    %150 = vmatpush1.msra.mxu0 0.0
    %151 = vmatprep.subr.mxu0 0.0
    %152 = vmatpush1.msra.mxu0 0.0
    %153 = vmatprep.subr.mxu0 0.0
    %154 = vmatpush1.msra.mxu0 0.0
    %155 = vmatprep.subr.mxu0 0.0
    %156 = vmatpush1.msra.mxu0 0.0
    %157 = vmatprep.subr.mxu0 0.0
    %158 = vmatpush1.msra.mxu0 0.0
    %159 = vmatprep.subr.mxu0 0.0
    %160 = vmatpush1.msra.mxu0 0.0
    %161 = vmatprep.subr.mxu0 0.0
    %162 = vmatpush1.msra.mxu0 0.0
    %163 = vmatprep.subr.mxu0 0.0
    %164 = vmatpush1.msra.mxu0 0.0
    %165 = vmatprep.subr.mxu0 0.0
    %166 = vmatpush1.msra.mxu0 0.0
    %167 = vmatprep.subr.mxu0 0.0
    %168 = vmatpush1.msra.mxu0 0.0
    %169 = vmatprep.subr.mxu0 0.0
    %170 = vmatpush1.msra.mxu0 0.0
    %171 = vmatprep.subr.mxu0 0.0
    %172 = vmatpush1.msra.mxu0 0.0
    %173 = vmatprep.subr.mxu0 0.0
    %174 = vmatpush1.msra.mxu0 0.0
    %175 = vmatprep.subr.mxu0 0.0
    %176 = vmatpush1.msra.mxu0 %v145
    %177 = vmatprep.subr.mxu0 0.0
    %178 = vmatpush1.msra.mxu0 %v58
    %179 = vmatprep.subr.mxu0 0.0
    %180 = vmatpush2.msra.mxu0 0.0
    %181 = vmatprep.subr.mxu0 0.0
    %182 = vmatpush2.msra.mxu0 0.0
    %183 = vmatprep.subr.mxu0 0.0
    %184 = vmatpush2.msra.mxu0 0.0
    %185 = vmatprep.subr.mxu0 0.0
    %186 = vmatpush2.msra.mxu0 0.0
    %187 = vmatprep.subr.mxu0 0.0
    %188 = vmatpush2.msra.mxu0 0.0
    %189 = vmatprep.subr.mxu0 0.0
    %190 = vmatpush2.msra.mxu0 0.0
    %191 = vmatprep.subr.mxu0 0.0
    %192 = vmatpush2.msra.mxu0 0.0
    %193 = vmatprep.subr.mxu0 0.0
    %194 = vmatpush2.msra.mxu0 0.0
    %195 = vmatprep.subr.mxu0 0.0
    %196 = vmatpush2.msra.mxu0 0.0
    %197 = vmatprep.subr.mxu0 0.0
    %198 = vmatpush2.msra.mxu0 0.0
    %199 = vmatprep.subr.mxu0 0.0
    %200 = vmatpush2.msra.mxu0 0.0
    %201 = vmatprep.subr.mxu0 0.0
    %202 = vmatpush2.msra.mxu0 0.0
    %203 = vmatprep.subr.mxu0 0.0
    %204 = vmatpush2.msra.mxu0 0.0
    %205 = vmatprep.subr.mxu0 0.0
    %206 = vmatpush2.msra.mxu0 0.0
    %207 = vmatprep.subr.mxu0 0.0
    %208 = vmatpush2.msra.mxu0 0.0
    %209 = vmatprep.subr.mxu0 0.0
    %210 = vmatpush2.msra.mxu0 0.0
    %211 = vmatprep.mubr.f32.mxu0 0.0
    %212 = vmatmul.mubr.f32.gmra.mxu0 %v142
    %v213 = vpop.f32.mrf.mxu0
    %v214 = vadd.f32 %v137, %v213
    %v215 = vpop.f32.mrf.mxu0
    %216 = vdwg.mxu0
    %v217 = vld [vmem:[#allocation5] sm:$0x1]
    %v219 = vlaneseq
    %v220 = vshrl.u32 %v219, 7
    %v221 = vsub.s32 0, %v220
    %v222 = vrot.slane %v217, %v221
    %v224 = vadd.f32 %v214, %v222
    %v225 = vmax.f32 %v224, 0.0
    %v226 = vld [vmem:[%s5] sm:$0xff]
    %v227 = vld [vmem:[%s5 + $0x8] sm:$0xff]
    %v228 = vld [vmem:[%s5 + $0x10] sm:$0xff]
    %v229 = vld [vmem:[%s5 + $0x18] sm:$0xff]
    %v230 = vld [vmem:[%s6] sm:$0x1]
    %v232 = vlaneseq
    %v233 = vshrl.u32 %v232, 7
    %v234 = vsub.s32 0, %v233
    %v235 = vrot.slane %v230, %v234
    %vm237 = vcmask 261120
    %v239 = vsel %vm237, %v225, 0
    %241 = vmatprep.subr.mxu0 0.0
    %242 = vmatpush1.msra.mxu0 0.0
    %243 = vmatprep.subr.mxu0 0.0
    %244 = vmatpush1.msra.mxu0 0.0
    %245 = vmatprep.subr.mxu0 0.0
    %246 = vmatpush1.msra.mxu0 0.0
    %247 = vmatprep.subr.mxu0 0.0
    %248 = vmatpush1.msra.mxu0 0.0
    %249 = vmatprep.subr.mxu0 0.0
    %250 = vmatpush1.msra.mxu0 0.0
    %251 = vmatprep.subr.mxu0 0.0
    %252 = vmatpush1.msra.mxu0 0.0
    %253 = vmatprep.subr.mxu0 0.0
    %254 = vmatpush1.msra.mxu0 0.0
    %255 = vmatprep.subr.mxu0 0.0
    %256 = vmatpush1.msra.mxu0 0.0
    %257 = vmatprep.subr.mxu0 0.0
    %258 = vmatpush1.msra.mxu0 0.0
    %259 = vmatprep.subr.mxu0 0.0
    %260 = vmatpush1.msra.mxu0 0.0
    %261 = vmatprep.subr.mxu0 0.0
    %262 = vmatpush1.msra.mxu0 0.0
    %263 = vmatprep.subr.mxu0 0.0
    %264 = vmatpush1.msra.mxu0 0.0
    %265 = vmatprep.subr.mxu0 0.0
    %266 = vmatpush1.msra.mxu0 %v229
    %267 = vmatprep.subr.mxu0 0.0
    %268 = vmatpush1.msra.mxu0 %v228
    %269 = vmatprep.subr.mxu0 0.0
    %270 = vmatpush1.msra.mxu0 %v227
    %271 = vmatprep.subr.mxu0 0.0
    %272 = vmatpush1.msra.mxu0 %v226
    %273 = vmatprep.subr.mxu0 0.0
    %274 = vmatpush2.msra.mxu0 0.0
    %275 = vmatprep.subr.mxu0 0.0
    %276 = vmatpush2.msra.mxu0 0.0
    %277 = vmatprep.subr.mxu0 0.0
    %278 = vmatpush2.msra.mxu0 0.0
    %279 = vmatprep.subr.mxu0 0.0
    %280 = vmatpush2.msra.mxu0 0.0
    %281 = vmatprep.subr.mxu0 0.0
    %282 = vmatpush2.msra.mxu0 0.0
    %283 = vmatprep.subr.mxu0 0.0
    %284 = vmatpush2.msra.mxu0 0.0
    %285 = vmatprep.subr.mxu0 0.0
    %286 = vmatpush2.msra.mxu0 0.0
    %287 = vmatprep.subr.mxu0 0.0
    %288 = vmatpush2.msra.mxu0 0.0
    %289 = vmatprep.subr.mxu0 0.0
    %290 = vmatpush2.msra.mxu0 0.0
    %291 = vmatprep.subr.mxu0 0.0
    %292 = vmatpush2.msra.mxu0 0.0
    %293 = vmatprep.subr.mxu0 0.0
    %294 = vmatpush2.msra.mxu0 0.0
    %295 = vmatprep.subr.mxu0 0.0
    %296 = vmatpush2.msra.mxu0 0.0
    %297 = vmatprep.subr.mxu0 0.0
    %298 = vmatpush2.msra.mxu0 0.0
    %299 = vmatprep.subr.mxu0 0.0
    %300 = vmatpush2.msra.mxu0 0.0
    %301 = vmatprep.subr.mxu0 0.0
    %302 = vmatpush2.msra.mxu0 0.0
    %303 = vmatprep.subr.mxu0 0.0
    %304 = vmatpush2.msra.mxu0 0.0
    %305 = vmatprep.mubr.f32.mxu0 0.0
    %306 = vmatmul.mubr.f32.gmra.mxu0 %v239
    %v307 = vpop.f32.mrf.mxu0
    %v308 = vadd.f32 %v235, %v307
    %v309 = vpop.f32.mrf.mxu0
    %310 = vdwg.mxu0
    %v311 = vmax.f32 %v308, 0.0
    %v312 = vld [vmem:[%s7] sm:$0xff]
    %v313 = vld [vmem:[%s7 + $0x8] sm:$0xff]
    %v314 = vld [vmem:[%s7 + $0x10] sm:$0xff]
    %v315 = vld [vmem:[%s7 + $0x18] sm:$0xff]
    %s316 = sld [smem:[#allocation2]]
    %v317 = vstv %s316
    %v319 = vsel %vm237, %v311, 0
    %321 = vmatprep.subr.mxu0 0.0
    %322 = vmatpush1.msra.mxu0 0.0
    %323 = vmatprep.subr.mxu0 0.0
    %324 = vmatpush1.msra.mxu0 0.0
    %325 = vmatprep.subr.mxu0 0.0
    %326 = vmatpush1.msra.mxu0 0.0
    %327 = vmatprep.subr.mxu0 0.0
    %328 = vmatpush1.msra.mxu0 0.0
    %329 = vmatprep.subr.mxu0 0.0
    %330 = vmatpush1.msra.mxu0 0.0
    %331 = vmatprep.subr.mxu0 0.0
    %332 = vmatpush1.msra.mxu0 0.0
    %333 = vmatprep.subr.mxu0 0.0
    %334 = vmatpush1.msra.mxu0 0.0
    %335 = vmatprep.subr.mxu0 0.0
    %336 = vmatpush1.msra.mxu0 0.0
    %337 = vmatprep.subr.mxu0 0.0
    %338 = vmatpush1.msra.mxu0 0.0
    %339 = vmatprep.subr.mxu0 0.0
    %340 = vmatpush1.msra.mxu0 0.0
    %341 = vmatprep.subr.mxu0 0.0
    %342 = vmatpush1.msra.mxu0 0.0
    %343 = vmatprep.subr.mxu0 0.0
    %344 = vmatpush1.msra.mxu0 0.0
    %345 = vmatprep.subr.mxu0 0.0
    %346 = vmatpush1.msra.mxu0 %v315
    %347 = vmatprep.subr.mxu0 0.0
    %348 = vmatpush1.msra.mxu0 %v314
    %349 = vmatprep.subr.mxu0 0.0
    %350 = vmatpush1.msra.mxu0 %v313
    %351 = vmatprep.subr.mxu0 0.0
    %352 = vmatpush1.msra.mxu0 %v312
    %353 = vmatprep.subr.mxu0 0.0
    %354 = vmatpush2.msra.mxu0 0.0
    %355 = vmatprep.subr.mxu0 0.0
    %356 = vmatpush2.msra.mxu0 0.0
    %357 = vmatprep.subr.mxu0 0.0
    %358 = vmatpush2.msra.mxu0 0.0
    %359 = vmatprep.subr.mxu0 0.0
    %360 = vmatpush2.msra.mxu0 0.0
    %361 = vmatprep.subr.mxu0 0.0
    %362 = vmatpush2.msra.mxu0 0.0
    %363 = vmatprep.subr.mxu0 0.0
    %364 = vmatpush2.msra.mxu0 0.0
    %365 = vmatprep.subr.mxu0 0.0
    %366 = vmatpush2.msra.mxu0 0.0
    %367 = vmatprep.subr.mxu0 0.0
    %368 = vmatpush2.msra.mxu0 0.0
    %369 = vmatprep.subr.mxu0 0.0
    %370 = vmatpush2.msra.mxu0 0.0
    %371 = vmatprep.subr.mxu0 0.0
    %372 = vmatpush2.msra.mxu0 0.0
    %373 = vmatprep.subr.mxu0 0.0
    %374 = vmatpush2.msra.mxu0 0.0
    %375 = vmatprep.subr.mxu0 0.0
    %376 = vmatpush2.msra.mxu0 0.0
    %377 = vmatprep.subr.mxu0 0.0
    %378 = vmatpush2.msra.mxu0 0.0
    %379 = vmatprep.subr.mxu0 0.0
    %380 = vmatpush2.msra.mxu0 0.0
    %381 = vmatprep.subr.mxu0 0.0
    %382 = vmatpush2.msra.mxu0 0.0
    %383 = vmatprep.subr.mxu0 0.0
    %384 = vmatpush2.msra.mxu0 0.0
    %385 = vmatprep.mubr.f32.mxu0 0.0
    %386 = vmatmul.mubr.f32.gmra.mxu0 %v319
    %v387 = vpop.f32.mrf.mxu0
    %v388 = vadd.f32 %v317, %v387
    %v389 = vpop.f32.mrf.mxu0
    %390 = vdwg.mxu0
    %vm391 = vcmask 7168
    %392 = vst.msk [vmem:[%s9] sm:$0xff] %vm391, %v388
    // Predicated region
    $region46: #{tpu_custom_call.1} parent=1 // pred_check
      _
    $region47: #{tpu_custom_call.1} parent=1 // pred_check_branch
      %394 = sbr.rel (0) target = $region49
    $region48: #{tpu_custom_call.1} parent=1 // pred_region
      _
    $region49: #{tpu_custom_call.1} parent=1 // pred_fallthru
      _
    // Predicated region
    $region50: #{tpu_custom_call.1} parent=1 // pred_check
      _
    $region51: #{tpu_custom_call.1} parent=1 // pred_check_branch
      %396 = sbr.rel (0) target = $region53
    $region52: #{tpu_custom_call.1} parent=1 // pred_region
      _
    $region53: #{tpu_custom_call.1} parent=1 // pred_fallthru
      _
    %397 = vsyncpa [#allocation4], 1
    %398 = vsyncpa [#allocation6], 1

</llo_original>
